<compile_context>
chip_gen: v7x
topology: tpu7x:2x2x1
jax: 0.10.0
libtpu: 0.0.40
codegen_flags: <defaults>
</compile_context>

<pallas_src>
import jax
import jax.numpy as jnp
from jax import lax
from jax.experimental import pallas as pl
from jax.experimental.pallas import tpu as pltpu


def _heads_kernel(feat_ref, w_ref, bce_ref, bkd_ref, ce_ref, kd_ref):
    cp = ce_ref.shape[1]                                     # padded class count

    f32 = feat_ref[...].astype(jnp.float32)                  # [TB, D]
    # 100 / max(||f||, 1e-12) per row, as a [TB, 1] column (EUP rsqrt).
    sq = jnp.sum(f32 * f32, axis=1, keepdims=True)           # [TB, 1]
    scale = 100.0 * lax.rsqrt(jnp.maximum(sq, 1e-24))        # [TB, 1]

    # Single fused MXU matmul over both heads: [TB, D] @ [D, 2*Cp] (bf16 operands, f32 acc).
    raw = jnp.dot(feat_ref[...].astype(w_ref.dtype), w_ref[...],
                  preferred_element_type=jnp.float32)        # [TB, 2*Cp]

    ce_ref[...] = (raw[:, :cp] + bce_ref[...]).astype(ce_ref.dtype)
    # kd = (normalize(f) @ W_kd + b_kd) * 100 == (f @ W_kd) * (100/||f||) + 100*b_kd
    kd_ref[...] = (raw[:, cp:] * scale + bkd_ref[...]).astype(kd_ref.dtype)


def student_heads(features, w_ce, b_ce, w_kd, b_kd, *, weight_dtype=jnp.bfloat16):
    """features: [B, D] f32; w_*: [D, C]; b_*: [1, C]  ->  (ce_out [B, C], kd_out [B, C])."""
    B, D = features.shape
    C = w_ce.shape[1]

    # Lane-align the class dim (multiple of 128) -> unmasked vector stores.
    Cp = pl.cdiv(C, 128) * 128

    def pad_c(a):
        return a if a.shape[-1] == Cp else jnp.pad(a, ((0, 0), (0, Cp - a.shape[-1])))

    # Fused bf16 head weight [D, 2*Cp]; biases stay f32 (kd bias pre-scaled by 100).
    w_cat = jnp.concatenate([pad_c(w_ce), pad_c(w_kd)], axis=1).astype(weight_dtype)
    bce = pad_c(b_ce).astype(jnp.float32)
    bkd = (pad_c(b_kd) * 100.0).astype(jnp.float32)

    # Batch tiling: single block at small B, 128-row tiles on a parallel axis otherwise.
    TB = B if (B <= 128 or B % 128 != 0) else 128
    grid = (B // TB,)

    ce, kd = pl.pallas_call(
        _heads_kernel,
        out_shape=(
            jax.ShapeDtypeStruct((B, Cp), jnp.float32),
            jax.ShapeDtypeStruct((B, Cp), jnp.float32),
        ),
        grid=grid,
        in_specs=[
            pl.BlockSpec((TB, D), lambda i: (i, 0)),
            pl.BlockSpec((D, 2 * Cp), lambda i: (0, 0)),   # weights VMEM-resident across steps
            pl.BlockSpec((1, Cp), lambda i: (0, 0)),
            pl.BlockSpec((1, Cp), lambda i: (0, 0)),
        ],
        out_specs=(
            pl.BlockSpec((TB, Cp), lambda i: (i, 0)),
            pl.BlockSpec((TB, Cp), lambda i: (i, 0)),
        ),
        compiler_params=pltpu.CompilerParams(
            dimension_semantics=("parallel",),
        ),
    )(features, w_cat, bce, bkd)

    return ce[:, :C], kd[:, :C]


def _reference(features, w_ce, b_ce, w_kd, b_kd):
    f = features.astype(jnp.float32)
    ce = f @ w_ce + b_ce
    fn = f / jnp.maximum(jnp.linalg.norm(f, axis=1, keepdims=True), 1e-12)
    kd = (fn @ w_kd + b_kd) * 100.0
    return ce, kd


if __name__ == "__main__":
    # Small, deterministic setup consistent with the module:
    #   in_features = 512 (ViT-B-16), num_classes kept small (128), batch = 8.
    B, D, C = 8, 512, 128
    key = jax.random.PRNGKey(0)
    k_feat, k_clip = jax.random.split(key)

    # Backbone features (stand-in for self.backbone(x) output).
    features = jax.random.normal(k_feat, (B, D), dtype=jnp.float32)

    # In __init__ both heads are initialized from the same CLIP text embeddings
    # (clip_weights.T) with zero bias — reproduce that deterministically.
    clip_weights_T = jax.random.normal(k_clip, (D, C), dtype=jnp.float32) * 0.02
    w_ce = clip_weights_T
    w_kd = clip_weights_T
    b_ce = jnp.zeros((1, C), dtype=jnp.float32)
    b_kd = jnp.zeros((1, C), dtype=jnp.float32)

    ce_out, kd_out = student_heads(features, w_ce, b_ce, w_kd, b_kd)
    jax.block_until_ready((ce_out, kd_out))

    ce_ref, kd_ref = _reference(features, w_ce, b_ce, w_kd, b_kd)
    assert ce_out.shape == (B, C) and kd_out.shape == (B, C)
    # Tolerances account for bf16 weight/feature rounding in the fused MXU matmul
    # (f32 accumulate); kd error is amplified by the *100 scale.
    assert float(jnp.max(jnp.abs(ce_out - ce_ref))) < 5e-2
    assert float(jnp.max(jnp.abs(kd_out - kd_ref))) < 5e-1

    print("KERNEL_OK")
</pallas_src>

<mosaic_0001>
module attributes {stable_mosaic.version = 11 : i64} {
  func.func @_heads_kernel(%arg0: i32, %arg1: memref<8x512xf32, #tpu.memory_space<vmem>>, %arg2: memref<512x256xbf16, #tpu.memory_space<vmem>>, %arg3: memref<1x128xf32, #tpu.memory_space<vmem>>, %arg4: memref<1x128xf32, #tpu.memory_space<vmem>>, %arg5: memref<8x128xf32, #tpu.memory_space<vmem>>, %arg6: memref<8x128xf32, #tpu.memory_space<vmem>>) attributes {dimension_semantics = [#tpu.dimension_semantics<parallel>], iteration_bounds = array<i64: 1>, scalar_prefetch = 0 : i64, scratch_operands = 0 : i64, tpu.core_type = #tpu.core_type<tc>, window_params = [{transform_indices = @transform_0, window_bounds = array<i64: 8, 512>}, {pipeline_mode = #tpu.pipeline_mode<synchronous>, transform_indices = @transform_1, window_bounds = array<i64: 512, 256>}, {pipeline_mode = #tpu.pipeline_mode<synchronous>, transform_indices = @transform_2, window_bounds = array<i64: 1, 128>}, {pipeline_mode = #tpu.pipeline_mode<synchronous>, transform_indices = @transform_3, window_bounds = array<i64: 1, 128>}, {transform_indices = @transform_4, window_bounds = array<i64: 8, 128>}, {transform_indices = @transform_5, window_bounds = array<i64: 8, 128>}]} {
    %c0 = arith.constant 0 : index
    %c0_0 = arith.constant 0 : index
    %0 = vector.load %arg1[%c0, %c0_0] : memref<8x512xf32, #tpu.memory_space<vmem>>, vector<8x512xf32>
    %1 = arith.mulf %0, %0 : vector<8x512xf32>
    %cst = arith.constant dense<0.000000e+00> : vector<8xf32>
    %2 = vector.multi_reduction <add>, %1, %cst [1] : vector<8x512xf32> to vector<8xf32>
    %3 = vector.shape_cast %2 : vector<8xf32> to vector<8x1xf32>
    %cst_1 = arith.constant 1.000000e-24 : f32
    %4 = vector.broadcast %cst_1 : f32 to vector<8x1xf32>
    %5 = arith.maximumf %3, %4 : vector<8x1xf32>
    %6 = math.rsqrt %5 : vector<8x1xf32>
    %cst_2 = arith.constant 1.000000e+02 : f32
    %7 = vector.broadcast %cst_2 : f32 to vector<8x1xf32>
    %8 = arith.mulf %7, %6 : vector<8x1xf32>
    %c0_3 = arith.constant 0 : index
    %c0_4 = arith.constant 0 : index
    %9 = vector.load %arg1[%c0_3, %c0_4] : memref<8x512xf32, #tpu.memory_space<vmem>>, vector<8x512xf32>
    %10 = arith.truncf %9 : vector<8x512xf32> to vector<8x512xbf16>
    %c0_5 = arith.constant 0 : index
    %c0_6 = arith.constant 0 : index
    %11 = vector.load %arg2[%c0_5, %c0_6] : memref<512x256xbf16, #tpu.memory_space<vmem>>, vector<512x256xbf16>
    %cst_7 = arith.constant dense<0.000000e+00> : vector<8x256xf32>
    %12 = tpu.matmul %10, %11, %cst_7 {dimension_numbers = #tpu.dot_dimension_numbers<[1], [0], [0], [1], [0, 0, 1, 1], [], []>} : vector<8x512xbf16>, vector<512x256xbf16>, vector<8x256xf32> -> vector<8x256xf32>
    %13 = vector.extract_strided_slice %12 {offsets = [0, 0], sizes = [8, 128], strides = [1, 1]} : vector<8x256xf32> to vector<8x128xf32>
    %c0_8 = arith.constant 0 : index
    %c0_9 = arith.constant 0 : index
    %14 = vector.load %arg3[%c0_8, %c0_9] : memref<1x128xf32, #tpu.memory_space<vmem>>, vector<1x128xf32>
    %15 = vector.broadcast %14 : vector<1x128xf32> to vector<8x128xf32>
    %16 = arith.addf %13, %15 : vector<8x128xf32>
    %c0_10 = arith.constant 0 : index
    %c0_11 = arith.constant 0 : index
    %17 = vector.load %arg5[%c0_10, %c0_11] : memref<8x128xf32, #tpu.memory_space<vmem>>, vector<8x128xf32>
    tpu.vector_store %arg5[%c0_10, %c0_11], %16 {strides = array<i32>} : memref<8x128xf32, #tpu.memory_space<vmem>>, vector<8x128xf32>,
    %18 = vector.extract_strided_slice %12 {offsets = [0, 128], sizes = [8, 128], strides = [1, 1]} : vector<8x256xf32> to vector<8x128xf32>
    %19 = vector.broadcast %8 : vector<8x1xf32> to vector<8x128xf32>
    %20 = arith.mulf %18, %19 : vector<8x128xf32>
    %c0_12 = arith.constant 0 : index
    %c0_13 = arith.constant 0 : index
    %21 = vector.load %arg4[%c0_12, %c0_13] : memref<1x128xf32, #tpu.memory_space<vmem>>, vector<1x128xf32>
    %22 = vector.broadcast %21 : vector<1x128xf32> to vector<8x128xf32>
    %23 = arith.addf %20, %22 : vector<8x128xf32>
    %c0_14 = arith.constant 0 : index
    %c0_15 = arith.constant 0 : index
    %24 = vector.load %arg6[%c0_14, %c0_15] : memref<8x128xf32, #tpu.memory_space<vmem>>, vector<8x128xf32>
    tpu.vector_store %arg6[%c0_14, %c0_15], %23 {strides = array<i32>} : memref<8x128xf32, #tpu.memory_space<vmem>>, vector<8x128xf32>,
    return
  }
  func.func @transform_0(%arg0: i32) -> (i32, i32) {
    %c0_i32 = arith.constant 0 : i32
    %c0_i32_0 = arith.constant 0 : i32
    return %arg0, %c0_i32 : i32, i32
  }
  func.func @transform_1(%arg0: i32) -> (i32, i32) {
    %c0_i32 = arith.constant 0 : i32
    %c0_i32_0 = arith.constant 0 : i32
    %c0_i32_1 = arith.constant 0 : i32
    return %c0_i32, %c0_i32_0 : i32, i32
  }
  func.func @transform_2(%arg0: i32) -> (i32, i32) {
    %c0_i32 = arith.constant 0 : i32
    %c0_i32_0 = arith.constant 0 : i32
    %c0_i32_1 = arith.constant 0 : i32
    return %c0_i32, %c0_i32_0 : i32, i32
  }
  func.func @transform_3(%arg0: i32) -> (i32, i32) {
    %c0_i32 = arith.constant 0 : i32
    %c0_i32_0 = arith.constant 0 : i32
    %c0_i32_1 = arith.constant 0 : i32
    return %c0_i32, %c0_i32_0 : i32, i32
  }
  func.func @transform_4(%arg0: i32) -> (i32, i32) {
    %c0_i32 = arith.constant 0 : i32
    %c0_i32_0 = arith.constant 0 : i32
    return %arg0, %c0_i32 : i32, i32
  }
  func.func @transform_5(%arg0: i32) -> (i32, i32) {
    %c0_i32 = arith.constant 0 : i32
    %c0_i32_0 = arith.constant 0 : i32
    return %arg0, %c0_i32 : i32, i32
  }
}

</mosaic_0001>

<llo_original>
// kernel: tpu_custom_call.1
$region0: #{tpu_custom_call.1}
  #allocation0 [shape = 'u32[]', space=smem, size = 0x4, offset = 0x4, fixed_abs, tag = 'smem constant byte address 0x4 - core index']
  #allocation1 [shape = 'u32[144,128]{1,0:T(1,128)}', space=vmem, size = 0x12000, scoped, tag = 'internal scratch']
  %s0 = inlined_call_operand.hbm [shape: f32[8,512], index: 0, kind: input, shape index: {}]
  %s1 = inlined_call_operand.hbm [shape: bf16[512,256], index: 1, kind: input, shape index: {}]
  %s2 = inlined_call_operand.vmem [shape: f32[1,128], index: 2, kind: input, shape index: {}]
  %s3 = inlined_call_operand.vmem [shape: f32[1,128], index: 3, kind: input, shape index: {}]
  %s4 = inlined_call_operand.hbm [shape: f32[8,128], index: 4, kind: output, shape index: {0}]
  %s5 = inlined_call_operand.hbm [shape: f32[8,128], index: 5, kind: output, shape index: {1}]
  %6 = xla_tuple %s4, %s5
  %s7 = sld [smem:[#allocation0]]
  $region42: #{tpu_custom_call.1} parent=0
    _
  %s9 = ssub.s32 1, %s7
  %s10 = scalar_select 0, %s9, %s7
  $region1: #{tpu_custom_call.1} parent=0
    #allocation2 [shape = 'u8[16384]{0}', space=vmem, size = 0x4000, scoped, tag = 'input window, operand 0, single buffered']
    #allocation3 [shape = 's32[1]{0}', space=sflag, size = 0x4, scoped, tag = 'scoped memory for tpu_custom_call.1']
    #allocation4 [shape = 's32[1]{0}', space=sflag, size = 0x4, scoped, tag = 'scoped memory for tpu_custom_call.1']
    #allocation5 [shape = 'u8[262144]{0}', space=vmem, size = 0x40000, scoped, tag = 'input window, operand 1, single buffered']
    #allocation6 [shape = 's32[1]{0}', space=sflag, size = 0x4, scoped, tag = 'scoped memory for tpu_custom_call.1']
    #allocation7 [shape = 'u8[4096]{0}', space=vmem, size = 0x1000, scoped, tag = 'output window, operand 0, single buffered']
    #allocation8 [shape = 'u8[4096]{0}', space=vmem, size = 0x1000, scoped, tag = 'output window, operand 1, single buffered']
    #allocation9 [shape = 's32[1]{0}', space=sflag, size = 0x4, scoped, tag = 'scoped memory for tpu_custom_call.1']
    %11 = vsyncpa [#allocation3], 0
    %12 = vsyncpa [#allocation6], 0
    %13 = vsyncpa [#allocation4], 0
    %14 = vsyncpa [#allocation9], 0
    // Predicated region
    $region2: #{tpu_custom_call.1} parent=1 // pred_check
      _
    $region3: #{tpu_custom_call.1} parent=1 // pred_check_branch
      %16 = sbr.rel (0) target = $region5
    $region4: #{tpu_custom_call.1} parent=1 // pred_region
      %s18 = ssub.s32 512, 512
      %19 = vsyncadd [#allocation3], %s18
      %s21 = sshll.u32 [#allocation2], 4
      %s22 = int_to_ptr.vmem [resolvable:$true] %s21
      %24 = dma.hbm_to_vmem [thread:$0]  %s0, 512, %s22, [#allocation3]
    $region5: #{tpu_custom_call.1} parent=1 // pred_fallthru
      _
    // Predicated region
    $region6: #{tpu_custom_call.1} parent=1 // pred_check
      _
    $region7: #{tpu_custom_call.1} parent=1 // pred_check_branch
      %26 = sbr.rel (0) target = $region9
    $region8: #{tpu_custom_call.1} parent=1 // pred_region
      %s28 = ssub.s32 8192, 8192
      %29 = vsyncadd [#allocation6], %s28
      %s30 = sshll.u32 [#allocation5], 4
      %s31 = int_to_ptr.vmem [resolvable:$true] %s30
      %36 = dma.hbm_to_vmem [thread:$0]  %s1, 8192, %s31, [#allocation6], 128, 128, 8
    $region9: #{tpu_custom_call.1} parent=1 // pred_fallthru
      _
    // Predicated region
    $region10: #{tpu_custom_call.1} parent=1 // pred_check
      _
    $region11: #{tpu_custom_call.1} parent=1 // pred_check_branch
      %38 = sbr.rel (0) target = $region13
    $region12: #{tpu_custom_call.1} parent=1 // pred_region
      _
    $region13: #{tpu_custom_call.1} parent=1 // pred_fallthru
      _
    // Predicated region
    $region14: #{tpu_custom_call.1} parent=1 // pred_check
      _
    $region15: #{tpu_custom_call.1} parent=1 // pred_check_branch
      %40 = sbr.rel (0) target = $region17
    $region16: #{tpu_custom_call.1} parent=1 // pred_region
      _
    $region17: #{tpu_custom_call.1} parent=1 // pred_fallthru
      _
    // Predicated region
    $region18: #{tpu_custom_call.1} parent=1 // pred_check
      _
    $region19: #{tpu_custom_call.1} parent=1 // pred_check_branch
      %42 = sbr.rel (0) target = $region21
    $region20: #{tpu_custom_call.1} parent=1 // pred_region
      %43 = dma.done [#allocation3], 512
    $region21: #{tpu_custom_call.1} parent=1 // pred_fallthru
      _
    // Predicated region
    $region22: #{tpu_custom_call.1} parent=1 // pred_check
      _
    $region23: #{tpu_custom_call.1} parent=1 // pred_check_branch
      %45 = sbr.rel (0) target = $region25
    $region24: #{tpu_custom_call.1} parent=1 // pred_region
      %46 = dma.done [#allocation6], 8192
    $region25: #{tpu_custom_call.1} parent=1 // pred_fallthru
      _
    %v47 = vld [vmem:[#allocation2] sm:$0xff]
    %v48 = vld [vmem:[#allocation2 + $0x8] sm:$0xff]
    %v49 = vld [vmem:[#allocation2 + $0x10] sm:$0xff]
    %v50 = vld [vmem:[#allocation2 + $0x18] sm:$0xff]
    %v51 = vmul.f32 %v47, %v47
    %v52 = vmul.f32 %v48, %v48
    %v53 = vmul.f32 %v49, %v49
    %v54 = vmul.f32 %v50, %v50
    %v55 = vadd.f32 %v51, %v52
    %v56 = vadd.f32 %v55, %v53
    %v57 = vadd.f32 %v56, %v54
    %58 = vadd.xlane.f32.xlu0 %v57
    %v59 = vpop.xlane.xlu0 %58
    %v60 = vmax.f32 %v59, 1e-24
    %v61 = vrsqrt.pop %v60
    %v62 = vmul.f32 %v61, 100.0
    %v63 = vpack.c.bf16 %v47, %v47
    %v64 = vpack.c.bf16 %v48, %v48
    %v65 = vpack.c.bf16 %v49, %v49
    %v66 = vpack.c.bf16 %v50, %v50
    %v67 = vld [vmem:[#allocation5] sm:$0xff]
    %v68 = vld [vmem:[#allocation5 + $0x8] sm:$0xff]
    %v69 = vld [vmem:[#allocation5 + $0x10] sm:$0xff]
    %v70 = vld [vmem:[#allocation5 + $0x18] sm:$0xff]
    %v71 = vld [vmem:[#allocation5 + $0x20] sm:$0xff]
    %v72 = vld [vmem:[#allocation5 + $0x28] sm:$0xff]
    %v73 = vld [vmem:[#allocation5 + $0x30] sm:$0xff]
    %v74 = vld [vmem:[#allocation5 + $0x38] sm:$0xff]
    %v75 = vld [vmem:[#allocation5 + $0x40] sm:$0xff]
    %v76 = vld [vmem:[#allocation5 + $0x48] sm:$0xff]
    %v77 = vld [vmem:[#allocation5 + $0x50] sm:$0xff]
    %v78 = vld [vmem:[#allocation5 + $0x58] sm:$0xff]
    %v79 = vld [vmem:[#allocation5 + $0x60] sm:$0xff]
    %v80 = vld [vmem:[#allocation5 + $0x68] sm:$0xff]
    %v81 = vld [vmem:[#allocation5 + $0x70] sm:$0xff]
    %v82 = vld [vmem:[#allocation5 + $0x78] sm:$0xff]
    %v83 = vld [vmem:[#allocation5 + $0x80] sm:$0xff]
    %v84 = vld [vmem:[#allocation5 + $0x88] sm:$0xff]
    %v85 = vld [vmem:[#allocation5 + $0x90] sm:$0xff]
    %v86 = vld [vmem:[#allocation5 + $0x98] sm:$0xff]
    %v87 = vld [vmem:[#allocation5 + $0xa0] sm:$0xff]
    %v88 = vld [vmem:[#allocation5 + $0xa8] sm:$0xff]
    %v89 = vld [vmem:[#allocation5 + $0xb0] sm:$0xff]
    %v90 = vld [vmem:[#allocation5 + $0xb8] sm:$0xff]
    %v91 = vld [vmem:[#allocation5 + $0xc0] sm:$0xff]
    %v92 = vld [vmem:[#allocation5 + $0xc8] sm:$0xff]
    %v93 = vld [vmem:[#allocation5 + $0xd0] sm:$0xff]
    %v94 = vld [vmem:[#allocation5 + $0xd8] sm:$0xff]
    %v95 = vld [vmem:[#allocation5 + $0xe0] sm:$0xff]
    %v96 = vld [vmem:[#allocation5 + $0xe8] sm:$0xff]
    %v97 = vld [vmem:[#allocation5 + $0xf0] sm:$0xff]
    %v98 = vld [vmem:[#allocation5 + $0xf8] sm:$0xff]
    %v99 = vld [vmem:[#allocation5 + $0x100] sm:$0xff]
    %v100 = vld [vmem:[#allocation5 + $0x108] sm:$0xff]
    %v101 = vld [vmem:[#allocation5 + $0x110] sm:$0xff]
    %v102 = vld [vmem:[#allocation5 + $0x118] sm:$0xff]
    %v103 = vld [vmem:[#allocation5 + $0x120] sm:$0xff]
    %v104 = vld [vmem:[#allocation5 + $0x128] sm:$0xff]
    %v105 = vld [vmem:[#allocation5 + $0x130] sm:$0xff]
    %v106 = vld [vmem:[#allocation5 + $0x138] sm:$0xff]
    %v107 = vld [vmem:[#allocation5 + $0x140] sm:$0xff]
    %v108 = vld [vmem:[#allocation5 + $0x148] sm:$0xff]
    %v109 = vld [vmem:[#allocation5 + $0x150] sm:$0xff]
    %v110 = vld [vmem:[#allocation5 + $0x158] sm:$0xff]
    %v111 = vld [vmem:[#allocation5 + $0x160] sm:$0xff]
    %v112 = vld [vmem:[#allocation5 + $0x168] sm:$0xff]
    %v113 = vld [vmem:[#allocation5 + $0x170] sm:$0xff]
    %v114 = vld [vmem:[#allocation5 + $0x178] sm:$0xff]
    %v115 = vld [vmem:[#allocation5 + $0x180] sm:$0xff]
    %v116 = vld [vmem:[#allocation5 + $0x188] sm:$0xff]
    %v117 = vld [vmem:[#allocation5 + $0x190] sm:$0xff]
    %v118 = vld [vmem:[#allocation5 + $0x198] sm:$0xff]
    %v119 = vld [vmem:[#allocation5 + $0x1a0] sm:$0xff]
    %v120 = vld [vmem:[#allocation5 + $0x1a8] sm:$0xff]
    %v121 = vld [vmem:[#allocation5 + $0x1b0] sm:$0xff]
    %v122 = vld [vmem:[#allocation5 + $0x1b8] sm:$0xff]
    %v123 = vld [vmem:[#allocation5 + $0x1c0] sm:$0xff]
    %v124 = vld [vmem:[#allocation5 + $0x1c8] sm:$0xff]
    %v125 = vld [vmem:[#allocation5 + $0x1d0] sm:$0xff]
    %v126 = vld [vmem:[#allocation5 + $0x1d8] sm:$0xff]
    %v127 = vld [vmem:[#allocation5 + $0x1e0] sm:$0xff]
    %v128 = vld [vmem:[#allocation5 + $0x1e8] sm:$0xff]
    %v129 = vld [vmem:[#allocation5 + $0x1f0] sm:$0xff]
    %v130 = vld [vmem:[#allocation5 + $0x1f8] sm:$0xff]
    %v195 = vunpack.c.l.b16 %v67
    %v196 = vunpack.c.h.b16 %v67
    %v197 = vunpack.c.l.b16 %v68
    %v198 = vunpack.c.h.b16 %v68
    %v199 = vunpack.c.l.b16 %v69
    %v200 = vunpack.c.h.b16 %v69
    %v201 = vunpack.c.l.b16 %v70
    %v202 = vunpack.c.h.b16 %v70
    %v203 = vunpack.c.l.b16 %v71
    %v204 = vunpack.c.h.b16 %v71
    %v205 = vunpack.c.l.b16 %v72
    %v206 = vunpack.c.h.b16 %v72
    %v207 = vunpack.c.l.b16 %v73
    %v208 = vunpack.c.h.b16 %v73
    %v209 = vunpack.c.l.b16 %v74
    %v210 = vunpack.c.h.b16 %v74
    %v211 = vunpack.c.l.b16 %v75
    %v212 = vunpack.c.h.b16 %v75
    %v213 = vunpack.c.l.b16 %v76
    %v214 = vunpack.c.h.b16 %v76
    %v215 = vunpack.c.l.b16 %v77
    %v216 = vunpack.c.h.b16 %v77
    %v217 = vunpack.c.l.b16 %v78
    %v218 = vunpack.c.h.b16 %v78
    %v219 = vunpack.c.l.b16 %v79
    %v220 = vunpack.c.h.b16 %v79
    %v221 = vunpack.c.l.b16 %v80
    %v222 = vunpack.c.h.b16 %v80
    %v223 = vunpack.c.l.b16 %v81
    %v224 = vunpack.c.h.b16 %v81
    %v225 = vunpack.c.l.b16 %v82
    %v226 = vunpack.c.h.b16 %v82
    %v227 = vunpack.c.l.b16 %v83
    %v228 = vunpack.c.h.b16 %v83
    %v229 = vunpack.c.l.b16 %v84
    %v230 = vunpack.c.h.b16 %v84
    %v231 = vunpack.c.l.b16 %v85
    %v232 = vunpack.c.h.b16 %v85
    %v233 = vunpack.c.l.b16 %v86
    %v234 = vunpack.c.h.b16 %v86
    %v235 = vunpack.c.l.b16 %v87
    %v236 = vunpack.c.h.b16 %v87
    %v237 = vunpack.c.l.b16 %v88
    %v238 = vunpack.c.h.b16 %v88
    %v239 = vunpack.c.l.b16 %v89
    %v240 = vunpack.c.h.b16 %v89
    %v241 = vunpack.c.l.b16 %v90
    %v242 = vunpack.c.h.b16 %v90
    %v243 = vunpack.c.l.b16 %v91
    %v244 = vunpack.c.h.b16 %v91
    %v245 = vunpack.c.l.b16 %v92
    %v246 = vunpack.c.h.b16 %v92
    %v247 = vunpack.c.l.b16 %v93
    %v248 = vunpack.c.h.b16 %v93
    %v249 = vunpack.c.l.b16 %v94
    %v250 = vunpack.c.h.b16 %v94
    %v251 = vunpack.c.l.b16 %v95
    %v252 = vunpack.c.h.b16 %v95
    %v253 = vunpack.c.l.b16 %v96
    %v254 = vunpack.c.h.b16 %v96
    %v255 = vunpack.c.l.b16 %v97
    %v256 = vunpack.c.h.b16 %v97
    %v257 = vunpack.c.l.b16 %v98
    %v258 = vunpack.c.h.b16 %v98
    %v259 = vunpack.c.l.b16 %v99
    %v260 = vunpack.c.h.b16 %v99
    %v261 = vunpack.c.l.b16 %v100
    %v262 = vunpack.c.h.b16 %v100
    %v263 = vunpack.c.l.b16 %v101
    %v264 = vunpack.c.h.b16 %v101
    %v265 = vunpack.c.l.b16 %v102
    %v266 = vunpack.c.h.b16 %v102
    %v267 = vunpack.c.l.b16 %v103
    %v268 = vunpack.c.h.b16 %v103
    %v269 = vunpack.c.l.b16 %v104
    %v270 = vunpack.c.h.b16 %v104
    %v271 = vunpack.c.l.b16 %v105
    %v272 = vunpack.c.h.b16 %v105
    %v273 = vunpack.c.l.b16 %v106
    %v274 = vunpack.c.h.b16 %v106
    %v275 = vunpack.c.l.b16 %v107
    %v276 = vunpack.c.h.b16 %v107
    %v277 = vunpack.c.l.b16 %v108
    %v278 = vunpack.c.h.b16 %v108
    %v279 = vunpack.c.l.b16 %v109
    %v280 = vunpack.c.h.b16 %v109
    %v281 = vunpack.c.l.b16 %v110
    %v282 = vunpack.c.h.b16 %v110
    %v283 = vunpack.c.l.b16 %v111
    %v284 = vunpack.c.h.b16 %v111
    %v285 = vunpack.c.l.b16 %v112
    %v286 = vunpack.c.h.b16 %v112
    %v287 = vunpack.c.l.b16 %v113
    %v288 = vunpack.c.h.b16 %v113
    %v289 = vunpack.c.l.b16 %v114
    %v290 = vunpack.c.h.b16 %v114
    %v291 = vunpack.c.l.b16 %v115
    %v292 = vunpack.c.h.b16 %v115
    %v293 = vunpack.c.l.b16 %v116
    %v294 = vunpack.c.h.b16 %v116
    %v295 = vunpack.c.l.b16 %v117
    %v296 = vunpack.c.h.b16 %v117
    %v297 = vunpack.c.l.b16 %v118
    %v298 = vunpack.c.h.b16 %v118
    %v299 = vunpack.c.l.b16 %v119
    %v300 = vunpack.c.h.b16 %v119
    %v301 = vunpack.c.l.b16 %v120
    %v302 = vunpack.c.h.b16 %v120
    %v303 = vunpack.c.l.b16 %v121
    %v304 = vunpack.c.h.b16 %v121
    %v305 = vunpack.c.l.b16 %v122
    %v306 = vunpack.c.h.b16 %v122
    %v307 = vunpack.c.l.b16 %v123
    %v308 = vunpack.c.h.b16 %v123
    %v309 = vunpack.c.l.b16 %v124
    %v310 = vunpack.c.h.b16 %v124
    %v311 = vunpack.c.l.b16 %v125
    %v312 = vunpack.c.h.b16 %v125
    %v313 = vunpack.c.l.b16 %v126
    %v314 = vunpack.c.h.b16 %v126
    %v315 = vunpack.c.l.b16 %v127
    %v316 = vunpack.c.h.b16 %v127
    %v317 = vunpack.c.l.b16 %v128
    %v318 = vunpack.c.h.b16 %v128
    %v319 = vunpack.c.l.b16 %v129
    %v320 = vunpack.c.h.b16 %v129
    %v321 = vunpack.c.l.b16 %v130
    %v322 = vunpack.c.h.b16 %v130
    %v323 = vpack.c.b16 %v197, %v195
    %v324 = vpack.c.b16 %v198, %v196
    %v325 = vpack.c.b16 %v201, %v199
    %v326 = vpack.c.b16 %v202, %v200
    %v327 = vpack.c.b16 %v205, %v203
    %v328 = vpack.c.b16 %v206, %v204
    %v329 = vpack.c.b16 %v209, %v207
    %v330 = vpack.c.b16 %v210, %v208
    %v331 = vpack.c.b16 %v213, %v211
    %v332 = vpack.c.b16 %v214, %v212
    %v333 = vpack.c.b16 %v217, %v215
    %v334 = vpack.c.b16 %v218, %v216
    %v335 = vpack.c.b16 %v221, %v219
    %v336 = vpack.c.b16 %v222, %v220
    %v337 = vpack.c.b16 %v225, %v223
    %v338 = vpack.c.b16 %v226, %v224
    %v339 = vpack.c.b16 %v229, %v227
    %v340 = vpack.c.b16 %v230, %v228
    %v341 = vpack.c.b16 %v233, %v231
    %v342 = vpack.c.b16 %v234, %v232
    %v343 = vpack.c.b16 %v237, %v235
    %v344 = vpack.c.b16 %v238, %v236
    %v345 = vpack.c.b16 %v241, %v239
    %v346 = vpack.c.b16 %v242, %v240
    %v347 = vpack.c.b16 %v245, %v243
    %v348 = vpack.c.b16 %v246, %v244
    %v349 = vpack.c.b16 %v249, %v247
    %v350 = vpack.c.b16 %v250, %v248
    %v351 = vpack.c.b16 %v253, %v251
    %v352 = vpack.c.b16 %v254, %v252
    %v353 = vpack.c.b16 %v257, %v255
    %v354 = vpack.c.b16 %v258, %v256
    %v355 = vpack.c.b16 %v261, %v259
    %v356 = vpack.c.b16 %v262, %v260
    %v357 = vpack.c.b16 %v265, %v263
    %v358 = vpack.c.b16 %v266, %v264
    %v359 = vpack.c.b16 %v269, %v267
    %v360 = vpack.c.b16 %v270, %v268
    %v361 = vpack.c.b16 %v273, %v271
    %v362 = vpack.c.b16 %v274, %v272
    %v363 = vpack.c.b16 %v277, %v275
    %v364 = vpack.c.b16 %v278, %v276
    %v365 = vpack.c.b16 %v281, %v279
    %v366 = vpack.c.b16 %v282, %v280
    %v367 = vpack.c.b16 %v285, %v283
    %v368 = vpack.c.b16 %v286, %v284
    %v369 = vpack.c.b16 %v289, %v287
    %v370 = vpack.c.b16 %v290, %v288
    %v371 = vpack.c.b16 %v293, %v291
    %v372 = vpack.c.b16 %v294, %v292
    %v373 = vpack.c.b16 %v297, %v295
    %v374 = vpack.c.b16 %v298, %v296
    %v375 = vpack.c.b16 %v301, %v299
    %v376 = vpack.c.b16 %v302, %v300
    %v377 = vpack.c.b16 %v305, %v303
    %v378 = vpack.c.b16 %v306, %v304
    %v379 = vpack.c.b16 %v309, %v307
    %v380 = vpack.c.b16 %v310, %v308
    %v381 = vpack.c.b16 %v313, %v311
    %v382 = vpack.c.b16 %v314, %v312
    %v383 = vpack.c.b16 %v317, %v315
    %v384 = vpack.c.b16 %v318, %v316
    %v385 = vpack.c.b16 %v321, %v319
    %v386 = vpack.c.b16 %v322, %v320
    %451 = vmatprep.subr.bf16.mxu0 %v324
    %452 = vmatpush1.bf16.msra.mxu0 %v323
    %453 = vmatprep.subr.bf16.mxu0 %v326
    %454 = vmatpush1.bf16.msra.mxu0 %v325
    %455 = vmatprep.subr.bf16.mxu0 %v328
    %456 = vmatpush1.bf16.msra.mxu0 %v327
    %457 = vmatprep.subr.bf16.mxu0 %v330
    %458 = vmatpush1.bf16.msra.mxu0 %v329
    %459 = vmatprep.subr.bf16.mxu0 %v332
    %460 = vmatpush1.bf16.msra.mxu0 %v331
    %461 = vmatprep.subr.bf16.mxu0 %v334
    %462 = vmatpush1.bf16.msra.mxu0 %v333
    %463 = vmatprep.subr.bf16.mxu0 %v336
    %464 = vmatpush1.bf16.msra.mxu0 %v335
    %465 = vmatprep.subr.bf16.mxu0 %v338
    %466 = vmatpush1.bf16.msra.mxu0 %v337
    %467 = vmatprep.subr.bf16.mxu0 %v340
    %468 = vmatpush1.bf16.msra.mxu0 %v339
    %469 = vmatprep.subr.bf16.mxu0 %v342
    %470 = vmatpush1.bf16.msra.mxu0 %v341
    %471 = vmatprep.subr.bf16.mxu0 %v344
    %472 = vmatpush1.bf16.msra.mxu0 %v343
    %473 = vmatprep.subr.bf16.mxu0 %v346
    %474 = vmatpush1.bf16.msra.mxu0 %v345
    %475 = vmatprep.subr.bf16.mxu0 %v348
    %476 = vmatpush1.bf16.msra.mxu0 %v347
    %477 = vmatprep.subr.bf16.mxu0 %v350
    %478 = vmatpush1.bf16.msra.mxu0 %v349
    %479 = vmatprep.subr.bf16.mxu0 %v352
    %480 = vmatpush1.bf16.msra.mxu0 %v351
    %481 = vmatprep.subr.bf16.mxu0 %v354
    %482 = vmatpush1.bf16.msra.mxu0 %v353
    %483 = vmatprep.mubr.bf16.mxu0 %v64
    %484 = vmatmul.mubr.bf16.gmra.mrb[0].mxu0 %v63
    %v485 = vpop.f32.mrb[0].mxu0
    %v486 = vadd.f32 0.0, %v485
    %v487 = vpop.f32.mrb[0].mxu0
    %v488 = vadd.f32 0.0, %v487
    %v489 = vpop.f32.mrb[0].mxu0
    %v490 = vpop.f32.mrb[0].mxu0
    %491 = vdwg.mxu0
    %492 = vmatprep.subr.bf16.mxu0 %v356
    %493 = vmatpush1.bf16.msra.mxu0 %v355
    %494 = vmatprep.subr.bf16.mxu0 %v358
    %495 = vmatpush1.bf16.msra.mxu0 %v357
    %496 = vmatprep.subr.bf16.mxu0 %v360
    %497 = vmatpush1.bf16.msra.mxu0 %v359
    %498 = vmatprep.subr.bf16.mxu0 %v362
    %499 = vmatpush1.bf16.msra.mxu0 %v361
    %500 = vmatprep.subr.bf16.mxu0 %v364
    %501 = vmatpush1.bf16.msra.mxu0 %v363
    %502 = vmatprep.subr.bf16.mxu0 %v366
    %503 = vmatpush1.bf16.msra.mxu0 %v365
    %504 = vmatprep.subr.bf16.mxu0 %v368
    %505 = vmatpush1.bf16.msra.mxu0 %v367
    %506 = vmatprep.subr.bf16.mxu0 %v370
    %507 = vmatpush1.bf16.msra.mxu0 %v369
    %508 = vmatprep.subr.bf16.mxu0 %v372
    %509 = vmatpush1.bf16.msra.mxu0 %v371
    %510 = vmatprep.subr.bf16.mxu0 %v374
    %511 = vmatpush1.bf16.msra.mxu0 %v373
    %512 = vmatprep.subr.bf16.mxu0 %v376
    %513 = vmatpush1.bf16.msra.mxu0 %v375
    %514 = vmatprep.subr.bf16.mxu0 %v378
    %515 = vmatpush1.bf16.msra.mxu0 %v377
    %516 = vmatprep.subr.bf16.mxu0 %v380
    %517 = vmatpush1.bf16.msra.mxu0 %v379
    %518 = vmatprep.subr.bf16.mxu0 %v382
    %519 = vmatpush1.bf16.msra.mxu0 %v381
    %520 = vmatprep.subr.bf16.mxu0 %v384
    %521 = vmatpush1.bf16.msra.mxu0 %v383
    %522 = vmatprep.subr.bf16.mxu0 %v386
    %523 = vmatpush1.bf16.msra.mxu0 %v385
    %524 = vmatprep.mubr.bf16.mxu0 %v66
    %525 = vmatmul.mubr.bf16.gmra.mrb[0].mxu0 %v65
    %v526 = vpop.f32.mrb[0].mxu0
    %v527 = vadd.f32 %v486, %v526
    %v528 = vpop.f32.mrb[0].mxu0
    %v529 = vadd.f32 %v488, %v528
    %v530 = vpop.f32.mrb[0].mxu0
    %v531 = vpop.f32.mrb[0].mxu0
    %532 = vdwg.mxu0
    %v533 = vld [vmem:[%s2] sm:$0x1]
    %v535 = vlaneseq
    %v536 = vshrl.u32 %v535, 7
    %v537 = vsub.s32 0, %v536
    %v538 = vrot.slane %v533, %v537
    %v540 = vadd.f32 %v527, %v538
    %541 = vst [vmem:[#allocation7] sm:$0xff] %v540
    %v542 = vmul.f32 %v529, %v62
    %v543 = vld [vmem:[%s3] sm:$0x1]
    %v545 = vlaneseq
    %v546 = vshrl.u32 %v545, 7
    %v547 = vsub.s32 0, %v546
    %v548 = vrot.slane %v543, %v547
    %v550 = vadd.f32 %v542, %v548
    %551 = vst [vmem:[#allocation8] sm:$0xff] %v550
    // Predicated region
    $region26: #{tpu_custom_call.1} parent=1 // pred_check
      _
    $region27: #{tpu_custom_call.1} parent=1 // pred_check_branch
      %553 = sbr.rel (0) target = $region29
    $region28: #{tpu_custom_call.1} parent=1 // pred_region
      %s555 = ssub.s32 128, 128
      %556 = vsyncadd [#allocation4], %s555
      %s558 = sshll.u32 [#allocation7], 4
      %s559 = int_to_ptr.vmem [resolvable:$true] %s558
      %561 = dma.vmem_to_hbm [thread:$0]  %s559, 128, %s4, [#allocation4]
    $region29: #{tpu_custom_call.1} parent=1 // pred_fallthru
      _
    // Predicated region
    $region30: #{tpu_custom_call.1} parent=1 // pred_check
      _
    $region31: #{tpu_custom_call.1} parent=1 // pred_check_branch
      %563 = sbr.rel (0) target = $region33
    $region32: #{tpu_custom_call.1} parent=1 // pred_region
      %s565 = ssub.s32 128, 128
      %566 = vsyncadd [#allocation9], %s565
      %s568 = sshll.u32 [#allocation8], 4
      %s569 = int_to_ptr.vmem [resolvable:$true] %s568
      %571 = dma.vmem_to_hbm [thread:$0]  %s569, 128, %s5, [#allocation9]
    $region33: #{tpu_custom_call.1} parent=1 // pred_fallthru
      _
    // Predicated region
    $region34: #{tpu_custom_call.1} parent=1 // pred_check
      _
    $region35: #{tpu_custom_call.1} parent=1 // pred_check_branch
      %573 = sbr.rel (0) target = $region37
    $region36: #{tpu_custom_call.1} parent=1 // pred_region
      %574 = dma.done [#allocation4], 128
    $region37: #{tpu_custom_call.1} parent=1 // pred_fallthru
      _
    // Predicated region
    $region38: #{tpu_custom_call.1} parent=1 // pred_check
      _
    $region39: #{tpu_custom_call.1} parent=1 // pred_check_branch
      %576 = sbr.rel (0) target = $region41
    $region40: #{tpu_custom_call.1} parent=1 // pred_region
      %577 = dma.done [#allocation9], 128
    $region41: #{tpu_custom_call.1} parent=1 // pred_fallthru
      _
    %578 = vsyncpa [#allocation3], 1
    %579 = vsyncpa [#allocation6], 1
    %580 = vsyncpa [#allocation4], 1
    %581 = vsyncpa [#allocation9], 1

</llo_original>
